<compile_context>
chip_gen: v7x
topology: tpu7x:2x2x1
jax: 0.10.0
libtpu: 0.0.40
codegen_flags: <defaults>
</compile_context>

<pallas_src>
import functools
import math

import jax
import jax.numpy as jnp
from jax.experimental import pallas as pl
from jax.experimental.pallas import tpu as pltpu

F32 = jnp.float32
BF16 = jnp.bfloat16
_DTYPES = {"bf16": jnp.bfloat16, "f32": jnp.float32}


def _round_up(x, m):
    return ((x + m - 1) // m) * m


def _vmem_limit():
    try:
        cap = int(pltpu.get_tpu_info().vmem_capacity_bytes)
        return min(int(cap * 3 // 4), 100 * 1024 * 1024)
    except Exception:
        return 48 * 1024 * 1024


_VMEM_LIMIT = _vmem_limit()


def _silu(y):
    # sigmoid via EUP exp + EUP approx reciprocal (keeps the VALU free)
    return y * pl.reciprocal(1.0 + jnp.exp(-y), approx=True)


# ---------------------------------------------------------------------------
# Matmul: (M,K)@(K,N) + bias (+ fused residual add, + fused SiLU)
# bf16 MXU feeds, f32 accumulator, configurable output dtype.
# ---------------------------------------------------------------------------
def _mm_epilogue(acc, bias_ref, add_ref, o_ref, activation):
    y = acc + bias_ref[...]
    if add_ref is not None:
        y = y + add_ref[...].astype(jnp.float32)
    if activation == "silu":
        y = _silu(y)
    o_ref[...] = y.astype(o_ref.dtype)


def _matmul_kernel(a_ref, b_ref, bias_ref, o_ref, acc_ref, *, activation):
    @pl.when(pl.program_id(2) == 0)
    def _init():
        acc_ref[...] = jnp.zeros_like(acc_ref)

    acc_ref[...] += jnp.dot(a_ref[...], b_ref[...],
                            preferred_element_type=jnp.float32)

    @pl.when(pl.program_id(2) == pl.num_programs(2) - 1)
    def _fin():
        _mm_epilogue(acc_ref[...], bias_ref, None, o_ref, activation)


def _matmul_add_kernel(a_ref, b_ref, bias_ref, add_ref, o_ref, acc_ref, *,
                       activation):
    @pl.when(pl.program_id(2) == 0)
    def _init():
        acc_ref[...] = jnp.zeros_like(acc_ref)

    acc_ref[...] += jnp.dot(a_ref[...], b_ref[...],
                            preferred_element_type=jnp.float32)

    @pl.when(pl.program_id(2) == pl.num_programs(2) - 1)
    def _fin():
        _mm_epilogue(acc_ref[...], bias_ref, add_ref, o_ref, activation)


_MAX_SINGLE_K = 4096
_MAX_TK = 4096


def _pick_tiles(M, K, N):
    # M <= 512 everywhere in this model: single M block -> weights streamed once.
    if M <= 1024:
        tm = M
    else:
        tm = next((t for t in (512, 256, 128) if M % t == 0), M)
    # N: largest exact divisor in {512,256,128}, otherwise a single full block
    # (320 / 960 / 4 are not 128-divisible) -> no N padding, lane-dense stores.
    tn = next((t for t in (512, 256, 128) if N % t == 0), N)
    # K: single block when small or not 128-divisible, else the largest
    # 128-multiple divisor <= 4096 (keeps grid-step count small).
    if K <= _MAX_SINGLE_K or K % 128 != 0:
        tk = K
    else:
        tk = next((t for t in range(_MAX_TK, 127, -128) if K % t == 0), K)
    return tm, tk, tn


@functools.lru_cache(maxsize=None)
def _matmul_call(M, K, N, tm, tk, tn, activation, fuse_add, out_dtype):
    grid = (M // tm, N // tn, K // tk)
    odt = _DTYPES[out_dtype]
    in_specs = [pl.BlockSpec((tm, tk), lambda i, j, k: (i, k)),
                pl.BlockSpec((tk, tn), lambda i, j, k: (k, j)),
                pl.BlockSpec((1, tn), lambda i, j, k: (0, j))]
    if fuse_add:
        in_specs.append(pl.BlockSpec((tm, tn), lambda i, j, k: (i, j)))
        kern = functools.partial(_matmul_add_kernel, activation=activation)
    else:
        kern = functools.partial(_matmul_kernel, activation=activation)
    return pl.pallas_call(
        kern,
        out_shape=jax.ShapeDtypeStruct((M, N), odt),
        grid_spec=pltpu.PrefetchScalarGridSpec(
            num_scalar_prefetch=0, grid=grid,
            in_specs=in_specs,
            out_specs=pl.BlockSpec((tm, tn), lambda i, j, k: (i, j)),
            scratch_shapes=[pltpu.VMEM((tm, tn), jnp.float32)]),
        compiler_params=pltpu.CompilerParams(
            dimension_semantics=("parallel", "parallel", "arbitrary"),
            vmem_limit_bytes=_VMEM_LIMIT),
    )


@functools.partial(jax.jit, static_argnames=("activation", "out_dtype"))
def _matmul_impl(a, w, bias, *, activation, out_dtype):
    M, K = a.shape
    _, N = w.shape
    tm, tk, tn = _pick_tiles(M, K, N)
    return _matmul_call(M, K, N, tm, tk, tn, activation, False, out_dtype)(
        a.astype(BF16), w, bias)


@functools.partial(jax.jit, static_argnames=("activation", "out_dtype"))
def _matmul_add_impl(a, w, bias, add, *, activation, out_dtype):
    M, K = a.shape
    _, N = w.shape
    tm, tk, tn = _pick_tiles(M, K, N)
    return _matmul_call(M, K, N, tm, tk, tn, activation, True, out_dtype)(
        a.astype(BF16), w, bias, add.astype(BF16))


def matmul(a, w, bias, add=None, activation="none", out_dtype="bf16"):
    if add is None:
        return _matmul_impl(a, w, bias, activation=activation,
                            out_dtype=out_dtype)
    return _matmul_add_impl(a, w, bias, add, activation=activation,
                            out_dtype=out_dtype)


# ---------------------------------------------------------------------------
# Fused GroupNorm (+affine, +optional SiLU) on native (HW, C), bf16 in/out.
# Per-group stats via a (1,C)x(C,G) membership matmul.
# ---------------------------------------------------------------------------
def _groupnorm_kernel(x_ref, mcg_ref, mgc_ref, g_ref, b_ref, o_ref, *,
                      inv_count, eps, act):
    x = x_ref[0].astype(jnp.float32)                       # (HW, C)
    s = jnp.sum(x, axis=0, keepdims=True)                  # (1, C)
    ss = jnp.sum(x * x, axis=0, keepdims=True)             # (1, C)
    gsum = jnp.dot(s, mcg_ref[...], preferred_element_type=jnp.float32)
    gss = jnp.dot(ss, mcg_ref[...], preferred_element_type=jnp.float32)
    mean_g = gsum * inv_count                               # (1, G)
    var_g = jnp.maximum(gss * inv_count - mean_g * mean_g, 0.0)
    inv_g = jax.lax.rsqrt(var_g + eps)                      # (1, G)
    mean_c = jnp.dot(mean_g, mgc_ref[...], preferred_element_type=jnp.float32)
    inv_c = jnp.dot(inv_g, mgc_ref[...], preferred_element_type=jnp.float32)
    y = (x - mean_c) * (inv_c * g_ref[...]) + b_ref[...]
    if act == "silu":
        y = _silu(y)
    o_ref[0] = y.astype(o_ref.dtype)


@functools.lru_cache(maxsize=None)
def _groupnorm_call(N, HW, C, G, eps, act):
    inv_count = 1.0 / float(HW * (C // G))
    return pl.pallas_call(
        functools.partial(_groupnorm_kernel, inv_count=inv_count, eps=eps,
                          act=act),
        out_shape=jax.ShapeDtypeStruct((N, HW, C), BF16),
        grid_spec=pltpu.PrefetchScalarGridSpec(
            num_scalar_prefetch=0, grid=(N,),
            in_specs=[pl.BlockSpec((1, HW, C), lambda n: (n, 0, 0)),
                      pl.BlockSpec((C, G), lambda n: (0, 0)),
                      pl.BlockSpec((G, C), lambda n: (0, 0)),
                      pl.BlockSpec((1, C), lambda n: (0, 0)),
                      pl.BlockSpec((1, C), lambda n: (0, 0))],
            out_specs=pl.BlockSpec((1, HW, C), lambda n: (n, 0, 0))),
        compiler_params=pltpu.CompilerParams(
            dimension_semantics=("parallel",),
            vmem_limit_bytes=_VMEM_LIMIT),
    )


@functools.partial(jax.jit, static_argnames=("groups", "eps", "act"))
def _groupnorm_impl(x, gamma, beta, *, groups, eps, act):
    N, H, W, C = x.shape
    HW = H * W
    cg = C // groups
    grp = jnp.arange(C, dtype=jnp.int32) // cg
    mgc = (grp[None, :] ==
           jnp.arange(groups, dtype=jnp.int32)[:, None]).astype(F32)  # (G, C)
    mcg = mgc.T                                                        # (C, G)
    out = _groupnorm_call(N, HW, C, groups, float(eps), act)(
        x.reshape(N, HW, C).astype(BF16), mcg, mgc, gamma, beta)
    return out.reshape(N, H, W, C)


def group_norm(x, p, eps, act="none", groups=32):
    return _groupnorm_impl(x, p["g"], p["b"], groups=groups, eps=float(eps),
                           act=act)


# ---------------------------------------------------------------------------
# Fused LayerNorm (+affine), bf16 in/out, f32 stats
# ---------------------------------------------------------------------------
def _layernorm_kernel(x_ref, g_ref, b_ref, o_ref, *, eps):
    x = x_ref[...].astype(jnp.float32)
    mean = jnp.mean(x, axis=-1, keepdims=True)
    xc = x - mean
    var = jnp.mean(xc * xc, axis=-1, keepdims=True)
    y = (xc * jax.lax.rsqrt(var + eps)) * g_ref[...] + b_ref[...]
    o_ref[...] = y.astype(o_ref.dtype)


@functools.lru_cache(maxsize=None)
def _layernorm_call(Rp, C, tr, eps):
    return pl.pallas_call(
        functools.partial(_layernorm_kernel, eps=eps),
        out_shape=jax.ShapeDtypeStruct((Rp, C), BF16),
        grid_spec=pltpu.PrefetchScalarGridSpec(
            num_scalar_prefetch=0, grid=(Rp // tr,),
            in_specs=[pl.BlockSpec((tr, C), lambda i: (i, 0)),
                      pl.BlockSpec((1, C), lambda i: (0, 0)),
                      pl.BlockSpec((1, C), lambda i: (0, 0))],
            out_specs=pl.BlockSpec((tr, C), lambda i: (i, 0))),
        compiler_params=pltpu.CompilerParams(
            dimension_semantics=("parallel",),
            vmem_limit_bytes=_VMEM_LIMIT),
    )


@functools.partial(jax.jit, static_argnames=("eps",))
def _layernorm_impl(x, gamma, beta, *, eps):
    B, S, C = x.shape
    R = B * S
    Rp = _round_up(R, 8)
    tr = Rp if Rp <= 512 else (256 if Rp % 256 == 0 else 128)
    xr = x.reshape(R, C).astype(BF16)
    if Rp != R:
        xr = jnp.pad(xr, ((0, Rp - R), (0, 0)))
    out = _layernorm_call(Rp, C, tr, float(eps))(xr, gamma, beta)
    return out[:R].reshape(B, S, C)


def layer_norm(x, p, eps=1e-5):
    return _layernorm_impl(x, p["g"], p["b"], eps=float(eps))


# ---------------------------------------------------------------------------
# GEGLU gate: x * gelu(gate); x / gate are two lane-aligned views of geglu1 out
# ---------------------------------------------------------------------------
def _geglu_kernel(x_ref, gate_ref, o_ref):
    x = x_ref[...].astype(jnp.float32)
    g = gate_ref[...].astype(jnp.float32)
    # exact erf-GELU; erf via Abramowitz & Stegun 7.1.26 (max abs err ~1.5e-7)
    z = g * 0.7071067811865476
    sign = jnp.where(z >= 0.0, 1.0, -1.0)
    az = jnp.abs(z)
    t = 1.0 / (1.0 + 0.3275911 * az)
    poly = t * (0.254829592 + t * (-0.284496736 + t * (1.421413741
               + t * (-1.453152027 + t * 1.061405429))))
    erf = sign * (1.0 - poly * jnp.exp(-az * az))
    o_ref[...] = (x * (0.5 * g * (1.0 + erf))).astype(o_ref.dtype)


@functools.lru_cache(maxsize=None)
def _geglu_call(Rp, C4, tr):
    return pl.pallas_call(
        _geglu_kernel,
        out_shape=jax.ShapeDtypeStruct((Rp, C4), BF16),
        grid_spec=pltpu.PrefetchScalarGridSpec(
            num_scalar_prefetch=0, grid=(Rp // tr,),
            in_specs=[pl.BlockSpec((tr, C4), lambda i: (i, 0)),
                      pl.BlockSpec((tr, C4), lambda i: (i, 1))],
            out_specs=pl.BlockSpec((tr, C4), lambda i: (i, 0))),
        compiler_params=pltpu.CompilerParams(
            dimension_semantics=("parallel",),
            vmem_limit_bytes=_VMEM_LIMIT),
    )


@jax.jit
def _geglu_impl(g):
    R, C8 = g.shape
    C4 = C8 // 2
    Rp = _round_up(R, 8)
    tr = Rp if Rp <= 512 else (256 if Rp % 256 == 0 else 128)
    gp = g.astype(BF16)
    if Rp != R:
        gp = jnp.pad(gp, ((0, Rp - R), (0, 0)))
    out = _geglu_call(Rp, C4, tr)(gp, gp)
    return out[:R]


# ---------------------------------------------------------------------------
# Fused softmax attention: heads batched per block, lane-dense (padded) head
# dim, scale pre-folded into q, bf16 matmuls + EUP approx reciprocal.
# ---------------------------------------------------------------------------
def _attn_kernel(q_ref, k_ref, v_ref, o_ref):
    q = q_ref[...]
    k = k_ref[...]
    v = v_ref[...]
    s = jnp.einsum("hqd,hkd->hqk", q, k, preferred_element_type=jnp.float32)
    m = jnp.max(s, axis=-1, keepdims=True)
    p = jnp.exp(s - m)
    denom = jnp.sum(p, axis=-1, keepdims=True)
    o = jnp.einsum("hqk,hkd->hqd", p.astype(v.dtype), v,
                   preferred_element_type=jnp.float32)
    o_ref[...] = (o * pl.reciprocal(denom, approx=True)).astype(o_ref.dtype)


@functools.lru_cache(maxsize=None)
def _attn_call(BH, G, Sq, Skv, dhp):
    return pl.pallas_call(
        _attn_kernel,
        out_shape=jax.ShapeDtypeStruct((BH, Sq, dhp), BF16),
        grid_spec=pltpu.PrefetchScalarGridSpec(
            num_scalar_prefetch=0, grid=(BH // G,),
            in_specs=[pl.BlockSpec((G, Sq, dhp), lambda i: (i, 0, 0)),
                      pl.BlockSpec((G, Skv, dhp), lambda i: (i, 0, 0)),
                      pl.BlockSpec((G, Skv, dhp), lambda i: (i, 0, 0))],
            out_specs=pl.BlockSpec((G, Sq, dhp), lambda i: (i, 0, 0))),
        compiler_params=pltpu.CompilerParams(
            dimension_semantics=("parallel",),     # v7x: split heads across TCs
            vmem_limit_bytes=_VMEM_LIMIT),
    )


@jax.jit
def _attention_impl(q, k, v):
    BH, Sq, dh = q.shape
    _, Skv, _ = k.shape
    dhp = _round_up(dh, 128)
    scale = 1.0 / math.sqrt(dh)
    qp = jnp.pad((q * scale).astype(BF16), ((0, 0), (0, 0), (0, dhp - dh)))
    kp = jnp.pad(k.astype(BF16), ((0, 0), (0, 0), (0, dhp - dh)))
    vp = jnp.pad(v.astype(BF16), ((0, 0), (0, 0), (0, dhp - dh)))
    G = next(g for g in (8, 4, 2, 1) if BH % g == 0)
    out = _attn_call(BH, G, Sq, Skv, dhp)(qp, kp, vp)
    return out[:, :, :dh]


def attention(q, k, v):
    """q: (BH,Sq,dh), k/v: (BH,Skv,dh) -> (BH,Sq,dh) bf16."""
    return _attention_impl(q, k, v)


# ---------------------------------------------------------------------------
# Glue: conv via bf16 im2col, attention / residual blocks
# ---------------------------------------------------------------------------
@functools.partial(jax.jit, static_argnames=("k", "stride", "padding"))
def _im2col(x, *, k, stride, padding):
    N, H, W, C = x.shape
    if padding:
        x = jnp.pad(x, ((0, 0), (padding, padding), (padding, padding), (0, 0)))
    Hp, Wp = H + 2 * padding, W + 2 * padding
    oh = (Hp - k) // stride + 1
    ow = (Wp - k) // stride + 1
    cols = []
    for i in range(k):
        for j in range(k):
            cols.append(x[:, i:i + (oh - 1) * stride + 1:stride,
                          j:j + (ow - 1) * stride + 1:stride, :])
    patches = jnp.concatenate(cols, axis=-1)
    return patches.reshape(N * oh * ow, k * k * C)


def _out_hw(H, W, k, stride, padding):
    return ((H + 2 * padding - k) // stride + 1,
            (W + 2 * padding - k) // stride + 1)


def conv2d(x, p, bias=None, add=None, activation="none", out_dtype="bf16"):
    # x: NHWC; p["w"] is pre-reshaped to (k*k*cin, cout) bf16 at init.
    N, H, W, _ = x.shape
    k, stride, pad, cout = p["k"], p["stride"], p["pad"], p["cout"]
    if bias is None:
        bias = p["b"]
    if k == 1 and stride == 1 and pad == 0:
        patches, (oh, ow) = x.reshape(N * H * W, -1), (H, W)
    else:
        patches = _im2col(x.astype(BF16), k=k, stride=stride, padding=pad)
        oh, ow = _out_hw(H, W, k, stride, pad)
    add2d = None if add is None else add.reshape(N * oh * ow, cout)
    y = matmul(patches, p["w"], bias, add=add2d, activation=activation,
               out_dtype=out_dtype)
    return y.reshape(N, oh, ow, cout)


def self_attention(p_in, p_out, x, n_head, res2d):
    B, S, C = x.shape
    dh = C // n_head
    qkv = matmul(x.reshape(B * S, C), p_in["w"], p_in["b"])   # no bias (zeros)
    qkv = qkv.reshape(B, S, 3, n_head, dh)
    q = qkv[:, :, 0].transpose(0, 2, 1, 3).reshape(B * n_head, S, dh)
    k = qkv[:, :, 1].transpose(0, 2, 1, 3).reshape(B * n_head, S, dh)
    v = qkv[:, :, 2].transpose(0, 2, 1, 3).reshape(B * n_head, S, dh)
    o = attention(q, k, v)
    o = o.reshape(B, n_head, S, dh).transpose(0, 2, 1, 3).reshape(B * S, C)
    o = matmul(o, p_out["w"], p_out["b"], add=res2d)          # fused + residual
    return o.reshape(B, S, C)


def cross_attention(pq, pk, pv, p_out, x, context, n_head, res2d):
    B, S, C = x.shape
    _, Skv, Dc = context.shape
    dh = C // n_head
    q = matmul(x.reshape(B * S, C), pq["w"], pq["b"])
    k = matmul(context.reshape(B * Skv, Dc), pk["w"], pk["b"])
    v = matmul(context.reshape(B * Skv, Dc), pv["w"], pv["b"])
    q = q.reshape(B, S, n_head, dh).transpose(0, 2, 1, 3).reshape(B * n_head, S, dh)
    k = k.reshape(B, Skv, n_head, dh).transpose(0, 2, 1, 3).reshape(B * n_head, Skv, dh)
    v = v.reshape(B, Skv, n_head, dh).transpose(0, 2, 1, 3).reshape(B * n_head, Skv, dh)
    o = attention(q, k, v)
    o = o.reshape(B, n_head, S, dh).transpose(0, 2, 1, 3).reshape(B * S, C)
    o = matmul(o, p_out["w"], p_out["b"], add=res2d)          # fused + residual
    return o.reshape(B, S, C)


def attention_block(p, x, context):
    N, H, W, C = x.shape
    n_head = p["n_head"]
    residue_long = x
    h = group_norm(x, p["gn"], eps=1e-6, act="none")
    h = conv2d(h, p["conv_in"])
    h = h.reshape(N, H * W, C)

    res = h.reshape(N * H * W, C)
    h = self_attention(p["attn1_in"], p["attn1_out"],
                       layer_norm(h, p["ln1"]), n_head, res)

    res = h.reshape(N * H * W, C)
    h = cross_attention(p["attn2_q"], p["attn2_k"], p["attn2_v"],
                        p["attn2_out"], layer_norm(h, p["ln2"]),
                        context, n_head, res)

    res = h.reshape(N * H * W, C)
    hn = layer_norm(h, p["ln3"])
    g = matmul(hn.reshape(N * H * W, C), p["geglu1"]["w"], p["geglu1"]["b"])
    gg = _geglu_impl(g)                       # split x/gate inside the kernel
    h = matmul(gg, p["geglu2"]["w"], p["geglu2"]["b"], add=res)   # fused + res
    h = h.reshape(N, H, W, C)
    return conv2d(h, p["conv_out"], add=residue_long)             # fused + res


def residual_block(p, feature, time_emb):
    residue = feature
    h = group_norm(feature, p["gn1"], eps=1e-5, act="silu")
    # time branch: silu -> linear; its (1,cout) result is folded into conv1 bias
    t = jax.nn.silu(time_emb)
    t = matmul(t, p["lin_time"]["w"], p["lin_time"]["b"], out_dtype="f32")
    h = conv2d(h, p["conv1"], bias=p["conv1"]["b"] + t)
    h = group_norm(h, p["gn2"], eps=1e-5, act="silu")
    if p["skip"] is None:
        res = residue
    else:
        res = conv2d(residue, p["skip"])
    return conv2d(h, p["conv2"], add=res)                          # fused + res


def upsample_block(p, x):
    x = jnp.repeat(jnp.repeat(x, 2, axis=1), 2, axis=2)   # nearest, 2x
    return conv2d(x, p)


def run_layers(layers, x, context, time_emb):
    for kind, p in layers:
        if kind == "conv":
            x = conv2d(x, p)
        elif kind == "res":
            x = residual_block(p, x, time_emb)
        elif kind == "attn":
            x = attention_block(p, x, context)
        elif kind == "up":
            x = upsample_block(p, x)
    return x


def diffusion_forward(params, latent_nchw, context, time):
    # TimeEmbedding: linear -> SiLU (fused epilogue) -> linear
    t = matmul(time, params["time"]["l1"]["w"], params["time"]["l1"]["b"],
               activation="silu", out_dtype="f32")
    t = matmul(t, params["time"]["l2"]["w"], params["time"]["l2"]["b"],
               out_dtype="f32")

    x = jnp.transpose(latent_nchw, (0, 2, 3, 1))   # NCHW -> NHWC
    skips = []
    for layers in params["enc"]:
        x = run_layers(layers, x, context, t)
        skips.append(x)
    x = run_layers(params["bottleneck"], x, context, t)
    for layers in params["dec"]:
        x = jnp.concatenate([x, skips.pop()], axis=-1)
        x = run_layers(layers, x, context, t)

    # UNET_OutputLayer: groupnorm -> silu -> conv
    x = group_norm(x, params["final"]["gn"], eps=1e-5, act="silu")
    x = conv2d(x, params["final"]["conv"], out_dtype="f32")
    return jnp.transpose(x, (0, 3, 1, 2))          # back to NCHW


# ---------------------------------------------------------------------------
# Deterministic parameter initialization (synthetic weights, no checkpoint).
# Weights stored in bf16 GEMM layout; biases as (1, N) f32.
# ---------------------------------------------------------------------------
class ParamGen:
    def __init__(self, key):
        self._key = key
        self._n = 0

    def normal(self, shape, scale):
        self._n += 1
        k = jax.random.fold_in(self._key, self._n)
        return jax.random.normal(k, shape, F32) * jnp.asarray(scale, F32)


def init_linear(rng, din, dout, bias=True):
    del bias  # absent bias == zeros; stored anyway (read cost is negligible)
    return {"w": rng.normal((din, dout), 1.0 / math.sqrt(din)).astype(BF16),
            "b": jnp.zeros((1, dout), F32)}


def init_conv(rng, cin, cout, k, stride=1, pad=None):
    if pad is None:
        pad = 1 if k == 3 else 0
    # weight pre-reshaped once to the im2col GEMM layout (k*k*cin, cout), bf16
    return {"w": rng.normal((k * k * cin, cout),
                            1.0 / math.sqrt(cin * k * k)).astype(BF16),
            "b": jnp.zeros((1, cout), F32),
            "k": k, "cin": cin, "cout": cout, "stride": stride, "pad": pad}


def init_norm(c):
    return {"g": jnp.ones((1, c), F32), "b": jnp.zeros((1, c), F32)}


def init_res(rng, cin, cout, n_time=1280):
    return {"gn1": init_norm(cin),
            "conv1": init_conv(rng, cin, cout, 3),
            "lin_time": init_linear(rng, n_time, cout),
            "gn2": init_norm(cout),
            "conv2": init_conv(rng, cout, cout, 3),
            "skip": None if cin == cout else init_conv(rng, cin, cout, 1)}


def init_attn(rng, n_head, n_embd, d_ctx=768):
    c = n_head * n_embd
    return {"n_head": n_head,
            "gn": init_norm(c),
            "conv_in": init_conv(rng, c, c, 1),
            "ln1": init_norm(c),
            "attn1_in": init_linear(rng, c, 3 * c, bias=False),
            "attn1_out": init_linear(rng, c, c),
            "ln2": init_norm(c),
            "attn2_q": init_linear(rng, c, c, bias=False),
            "attn2_k": init_linear(rng, d_ctx, c, bias=False),
            "attn2_v": init_linear(rng, d_ctx, c, bias=False),
            "attn2_out": init_linear(rng, c, c),
            "ln3": init_norm(c),
            "geglu1": init_linear(rng, c, 4 * c * 2),
            "geglu2": init_linear(rng, 4 * c, c),
            "conv_out": init_conv(rng, c, c, 1)}


def init_diffusion(rng):
    return {
        "time": {"l1": init_linear(rng, 320, 1280),
                 "l2": init_linear(rng, 1280, 1280)},
        "enc": [
            [("conv", init_conv(rng, 4, 320, 3, 1, 1))],
            [("res", init_res(rng, 320, 320)), ("attn", init_attn(rng, 8, 40))],
            [("res", init_res(rng, 320, 320)), ("attn", init_attn(rng, 8, 40))],
            [("conv", init_conv(rng, 320, 320, 3, 2, 1))],
            [("res", init_res(rng, 320, 640)), ("attn", init_attn(rng, 8, 80))],
            [("res", init_res(rng, 640, 640)), ("attn", init_attn(rng, 8, 80))],
            [("conv", init_conv(rng, 640, 640, 3, 2, 1))],
            [("res", init_res(rng, 640, 1280)), ("attn", init_attn(rng, 8, 160))],
            [("res", init_res(rng, 1280, 1280)), ("attn", init_attn(rng, 8, 160))],
            [("conv", init_conv(rng, 1280, 1280, 3, 2, 1))],
            [("res", init_res(rng, 1280, 1280))],
            [("res", init_res(rng, 1280, 1280))],
        ],
        "bottleneck": [("res", init_res(rng, 1280, 1280)),
                       ("attn", init_attn(rng, 8, 160)),
                       ("res", init_res(rng, 1280, 1280))],
        "dec": [
            [("res", init_res(rng, 2560, 1280))],
            [("res", init_res(rng, 2560, 1280))],
            [("res", init_res(rng, 2560, 1280)), ("up", init_conv(rng, 1280, 1280, 3, 1, 1))],
            [("res", init_res(rng, 2560, 1280)), ("attn", init_attn(rng, 8, 160))],
            [("res", init_res(rng, 2560, 1280)), ("attn", init_attn(rng, 8, 160))],
            [("res", init_res(rng, 1920, 1280)), ("attn", init_attn(rng, 8, 160)),
             ("up", init_conv(rng, 1280, 1280, 3, 1, 1))],
            [("res", init_res(rng, 1920, 640)), ("attn", init_attn(rng, 8, 80))],
            [("res", init_res(rng, 1280, 640)), ("attn", init_attn(rng, 8, 80))],
            [("res", init_res(rng, 960, 640)), ("attn", init_attn(rng, 8, 80)),
             ("up", init_conv(rng, 640, 640, 3, 1, 1))],
            [("res", init_res(rng, 960, 320)), ("attn", init_attn(rng, 8, 40))],
            [("res", init_res(rng, 640, 320)), ("attn", init_attn(rng, 8, 40))],
            [("res", init_res(rng, 640, 320)), ("attn", init_attn(rng, 8, 40))],
        ],
        "final": {"gn": init_norm(320), "conv": init_conv(rng, 320, 4, 3, 1, 1)},
    }


# ---------------------------------------------------------------------------
if __name__ == "__main__":
    key = jax.random.PRNGKey(0)
    rng = ParamGen(jax.random.fold_in(key, 1))
    params = init_diffusion(rng)

    k1, k2, k3 = jax.random.split(jax.random.fold_in(key, 2), 3)
    latent = jax.random.normal(k1, (2, 4, 16, 16), F32)    # NCHW, like PyTorch
    context = jax.random.normal(k2, (2, 8, 768), F32)      # (B, seq, d_context)
    time = jax.random.normal(k3, (1, 320), F32)            # (1, n_embd)

    out = diffusion_forward(params, latent, context, time)
    out = jax.block_until_ready(out)

    assert out.shape == (2, 4, 16, 16), out.shape
    assert bool(jnp.all(jnp.isfinite(out)))
    print("KERNEL_OK")
</pallas_src>

<mosaic_0001>
module attributes {stable_mosaic.version = 11 : i64} {
  func.func @_matmul_kernel(%arg0: i32, %arg1: i32, %arg2: i32, %arg3: memref<1x320xbf16, #tpu.memory_space<vmem>>, %arg4: memref<320x256xbf16, #tpu.memory_space<vmem>>, %arg5: memref<1x256xf32, #tpu.memory_space<vmem>>, %arg6: memref<1x256xf32, #tpu.memory_space<vmem>>, %arg7: memref<1x256xf32, #tpu.memory_space<vmem>>) attributes {dimension_semantics = [#tpu.dimension_semantics<parallel>, #tpu.dimension_semantics<parallel>, #tpu.dimension_semantics<arbitrary>], iteration_bounds = array<i64: 1, 5, 1>, scalar_prefetch = 0 : i64, scratch_operands = 1 : i64, tpu.core_type = #tpu.core_type<tc>, window_params = [{transform_indices = @transform_0, window_bounds = array<i64: 1, 320>}, {transform_indices = @transform_1, window_bounds = array<i64: 320, 256>}, {transform_indices = @transform_2, window_bounds = array<i64: 1, 256>}, {transform_indices = @transform_3, window_bounds = array<i64: 1, 256>}]} {
    %c0_i32 = arith.constant 0 : i32
    %0 = arith.cmpi eq, %arg2, %c0_i32 : i32
    %1 = arith.extui %0 : i1 to i32
    %c0_i32_0 = arith.constant 0 : i32
    %2 = arith.cmpi ne, %1, %c0_i32_0 : i32
    scf.if %2 {
      %cst_10 = arith.constant 0.000000e+00 : f32
      %12 = vector.broadcast %cst_10 : f32 to vector<1x256xf32>
      %c0_11 = arith.constant 0 : index
      %c0_12 = arith.constant 0 : index
      %13 = vector.load %arg7[%c0_11, %c0_12] : memref<1x256xf32, #tpu.memory_space<vmem>>, vector<1x256xf32>
      tpu.vector_store %arg7[%c0_11, %c0_12], %12 {strides = array<i32>} : memref<1x256xf32, #tpu.memory_space<vmem>>, vector<1x256xf32>,
    } else {
    }
    %c0 = arith.constant 0 : index
    %c0_1 = arith.constant 0 : index
    %3 = vector.load %arg7[%c0, %c0_1] : memref<1x256xf32, #tpu.memory_space<vmem>>, vector<1x256xf32>
    %c0_2 = arith.constant 0 : index
    %c0_3 = arith.constant 0 : index
    %4 = vector.load %arg3[%c0_2, %c0_3] : memref<1x320xbf16, #tpu.memory_space<vmem>>, vector<1x320xbf16>
    %c0_4 = arith.constant 0 : index
    %c0_5 = arith.constant 0 : index
    %5 = vector.load %arg4[%c0_4, %c0_5] : memref<320x256xbf16, #tpu.memory_space<vmem>>, vector<320x256xbf16>
    %cst = arith.constant dense<0.000000e+00> : vector<1x256xf32>
    %6 = tpu.matmul %4, %5, %cst {dimension_numbers = #tpu.dot_dimension_numbers<[1], [0], [0], [1], [0, 0, 1, 1], [], []>} : vector<1x320xbf16>, vector<320x256xbf16>, vector<1x256xf32> -> vector<1x256xf32>
    %7 = arith.addf %3, %6 : vector<1x256xf32>
    %c0_6 = arith.constant 0 : index
    %c0_7 = arith.constant 0 : index
    %8 = vector.load %arg7[%c0_6, %c0_7] : memref<1x256xf32, #tpu.memory_space<vmem>>, vector<1x256xf32>
    tpu.vector_store %arg7[%c0_6, %c0_7], %7 {strides = array<i32>} : memref<1x256xf32, #tpu.memory_space<vmem>>, vector<1x256xf32>,
    %c0_i32_8 = arith.constant 0 : i32
    %9 = arith.cmpi eq, %arg2, %c0_i32_8 : i32
    %10 = arith.extui %9 : i1 to i32
    %c0_i32_9 = arith.constant 0 : i32
    %11 = arith.cmpi ne, %10, %c0_i32_9 : i32
    scf.if %11 {
      %c0_10 = arith.constant 0 : index
      %c0_11 = arith.constant 0 : index
      %12 = vector.load %arg7[%c0_10, %c0_11] : memref<1x256xf32, #tpu.memory_space<vmem>>, vector<1x256xf32>
      %c0_12 = arith.constant 0 : index
      %c0_13 = arith.constant 0 : index
      %13 = vector.load %arg5[%c0_12, %c0_13] : memref<1x256xf32, #tpu.memory_space<vmem>>, vector<1x256xf32>
      %14 = arith.addf %12, %13 : vector<1x256xf32>
      %cst_14 = arith.constant 0.000000e+00 : f32
      %15 = vector.broadcast %cst_14 : f32 to vector<1x256xf32>
      %16 = arith.subf %15, %14 : vector<1x256xf32>
      %17 = math.exp %16 : vector<1x256xf32>
      %cst_15 = arith.constant 1.000000e+00 : f32
      %18 = vector.broadcast %cst_15 : f32 to vector<1x256xf32>
      %19 = arith.addf %18, %17 : vector<1x256xf32>
      %20 = tpu.reciprocal %19 {approx = true} : vector<1x256xf32> -> vector<1x256xf32>
      %21 = arith.mulf %14, %20 : vector<1x256xf32>
      %c0_16 = arith.constant 0 : index
      %c0_17 = arith.constant 0 : index
      %22 = vector.load %arg6[%c0_16, %c0_17] : memref<1x256xf32, #tpu.memory_space<vmem>>, vector<1x256xf32>
      tpu.vector_store %arg6[%c0_16, %c0_17], %21 {strides = array<i32>} : memref<1x256xf32, #tpu.memory_space<vmem>>, vector<1x256xf32>,
    } else {
    }
    return
  }
  func.func @transform_0(%arg0: i32, %arg1: i32, %arg2: i32) -> (i32, i32) {
    %c0_i32 = arith.constant 0 : i32
    return %arg0, %arg2 : i32, i32
  }
  func.func @transform_1(%arg0: i32, %arg1: i32, %arg2: i32) -> (i32, i32) {
    %c0_i32 = arith.constant 0 : i32
    return %arg2, %arg1 : i32, i32
  }
  func.func @transform_2(%arg0: i32, %arg1: i32, %arg2: i32) -> (i32, i32) {
    %c0_i32 = arith.constant 0 : i32
    %c0_i32_0 = arith.constant 0 : i32
    return %c0_i32, %arg1 : i32, i32
  }
  func.func @transform_3(%arg0: i32, %arg1: i32, %arg2: i32) -> (i32, i32) {
    %c0_i32 = arith.constant 0 : i32
    return %arg0, %arg1 : i32, i32
  }
}

</mosaic_0001>

<llo_original>
// kernel: _matmul_impl.1
$region0: #{_matmul_impl.1}
  #allocation0 [shape = 'u32[]', space=smem, size = 0x4, offset = 0x4, fixed_abs, tag = 'smem constant byte address 0x4 - core index']
  #allocation1 [shape = 'u32[144,128]{1,0:T(1,128)}', space=vmem, size = 0x12000, scoped, tag = 'internal scratch']
  #allocation2 [shape = 'f32[1,256]{1,0:T(1,128)}', space=vmem, size = 0x400, scoped, tag = 'scratch operand']
  %s0 = inlined_call_operand.vmem [shape: bf16[1,320], index: 0, kind: input, shape index: {}]
  %s1 = inlined_call_operand.hbm [shape: bf16[320,1280], index: 1, kind: input, shape index: {}]
  %s2 = inlined_call_operand.vmem [shape: f32[1,1280], index: 2, kind: input, shape index: {}]
  %s3 = inlined_call_operand.hbm [shape: f32[1,1280], index: 3, kind: output, shape index: {}]
  %s4 = sld [smem:[#allocation0]]
  $region57: #{_matmul_impl.1} parent=0
    _
  %s6 = ssub.s32 1, %s4
  %s7 = scalar_select 0, %s6, %s4
  $region1: #{_matmul_impl.1} parent=0
    #allocation3 [shape = 'u8[327680]{0}', space=vmem, size = 0x50000, scoped, tag = 'input window, operand 1']
    #allocation4 [shape = 's32[2]{0}', space=sflag, size = 0x8, scoped, tag = 'scoped memory for _matmul_impl.1']
    #allocation5 [shape = 's32[2]{0}', space=sflag, size = 0x8, scoped, tag = 'scoped memory for _matmul_impl.1']
    #allocation6 [shape = 'u8[2048]{0}', space=vmem, size = 0x800, scoped, tag = 'output window, operand 0']
    %8 = vsyncpa [#allocation4], 0
    %s9 = scalar_lea.sflag [#allocation4], 1
    %10 = vsyncpa %s9, 0
    %11 = vsyncpa [#allocation5], 0
    %s12 = scalar_lea.sflag [#allocation5], 1
    %13 = vsyncpa %s12, 0
    loop: start=0, step=1, limit=7
    $region2: #{_matmul_impl.1} parent=1 // loop_pre_header
      _
    $region3: #{_matmul_impl.1} parent=1 // loop_header
      %s15 = sphi 0, %s19
      %p16 = scmp.ge.s32.totalorder %s15, 7
      %s22 = sphi 0, %s41
      %s23 = sphi 0, %s37
      %s24 = sphi 0, %s33
      %s25 = sphi 0, %s22
      %s26 = sphi 0, %s23
      %s27 = sphi 0, %s24
      %s28 = sphi 0, %s25
      %s29 = sphi 0, %s26
      %s30 = sphi 0, %s27
      %s46 = sphi 0, %s48
      %s49 = sphi 0, %s46
      %s50 = sphi 0, %s49
      %s66 = sphi 0, %s50
      %s74 = sphi 0, %s76
      %s77 = sphi 0, %s74
      %s78 = sphi 0, %s77
      %s94 = sphi 0, %s78
      %s100 = sphi 0, %s102
      %s103 = sphi 0, %s100
      %s104 = sphi 0, %s103
      %s120 = sphi 0, %s104
      %s128 = sphi 0, %s130
      %s131 = sphi 0, %s128
      %s132 = sphi 0, %s131
      %s148 = sphi 0, %s132
    $region4: #{_matmul_impl.1} parent=1 // loop_header_branch
      %18 = sbr.rel (%p16) target = $region8
    $region5: #{_matmul_impl.1} parent=1 // loop_body
      %s20 = ssub.s32 %s15, 1
      %s21 = ssub.s32 %s15, 2
      %s31 = sadd.s32 1, %s24
      %p32 = scmp.ge.s32.totalorder %s31, 1
      %s33 = scalar_select %p32, 0, %s31
      %s34 = sadd.s32 1, %s23
      %s35 = scalar_select %p32, %s34, %s23
      %p36 = scmp.ge.s32.totalorder %s35, 5
      %s37 = scalar_select %p36, 0, %s35
      %s38 = sadd.s32 1, %s22
      %s39 = scalar_select %p36, %s38, %s22
      %p40 = scmp.ge.s32.totalorder %s39, 1
      %s41 = scalar_select %p40, 0, %s39
      %s42 = ssub.s32 %s22, %s41
      %s43 = ssub.s32 %s24, %s33
      %s44 = sor.u32 %s42, %s43
      %p45 = scmp.eq.s32.totalorder %s44, 0
      %s47 = sadd.s32 %s46, 1
      %s48 = scalar_select %p45, %s46, %s47
      %p51 = pneg %p45
      %p52 = scmp.eq.s32.totalorder %s15, 4
      %p53 = por %p51, %p52
      %p54 = scmp.ne.s32.totalorder %s46, %s49
      %p55 = scmp.eq.s32.totalorder %s15, 0
      %p56 = por %p54, %p55
      %p57 = scmp.ne.s32.totalorder %s46, %s49
      %p58 = scmp.eq.s32.totalorder %s20, 4
      %p59 = por %p57, %p58
      %p60 = scmp.ne.s32.totalorder %s49, %s50
      %p61 = scmp.eq.s32.totalorder %s20, 0
      %p62 = por %p60, %p61
      %p63 = scmp.ne.s32.totalorder %s49, %s50
      %p64 = scmp.eq.s32.totalorder %s21, 4
      %p65 = por %p63, %p64
      %p67 = scmp.ne.s32.totalorder %s50, %s66
      %p68 = scmp.eq.s32.totalorder %s21, 0
      %p69 = por %p67, %p68
      %s70 = ssub.s32 %s24, %s33
      %s71 = ssub.s32 %s23, %s37
      %s72 = sor.u32 %s70, %s71
      %p73 = scmp.eq.s32.totalorder %s72, 0
      %s75 = sadd.s32 %s74, 1
      %s76 = scalar_select %p73, %s74, %s75
      %p79 = pneg %p73
      %p80 = scmp.eq.s32.totalorder %s15, 4
      %p81 = por %p79, %p80
      %p82 = scmp.ne.s32.totalorder %s74, %s77
      %p83 = scmp.eq.s32.totalorder %s15, 0
      %p84 = por %p82, %p83
      %p85 = scmp.ne.s32.totalorder %s74, %s77
      %p86 = scmp.eq.s32.totalorder %s20, 4
      %p87 = por %p85, %p86
      %p88 = scmp.ne.s32.totalorder %s77, %s78
      %p89 = scmp.eq.s32.totalorder %s20, 0
      %p90 = por %p88, %p89
      %p91 = scmp.ne.s32.totalorder %s77, %s78
      %p92 = scmp.eq.s32.totalorder %s21, 4
      %p93 = por %p91, %p92
      %p95 = scmp.ne.s32.totalorder %s78, %s94
      %p96 = scmp.eq.s32.totalorder %s21, 0
      %p97 = por %p95, %p96
      %s98 = ssub.s32 %s23, %s37
      %p99 = scmp.eq.s32.totalorder %s98, 0
      %s101 = sadd.s32 %s100, 1
      %s102 = scalar_select %p99, %s100, %s101
      %p105 = pneg %p99
      %p106 = scmp.eq.s32.totalorder %s15, 4
      %p107 = por %p105, %p106
      %p108 = scmp.ne.s32.totalorder %s100, %s103
      %p109 = scmp.eq.s32.totalorder %s15, 0
      %p110 = por %p108, %p109
      %p111 = scmp.ne.s32.totalorder %s100, %s103
      %p112 = scmp.eq.s32.totalorder %s20, 4
      %p113 = por %p111, %p112
      %p114 = scmp.ne.s32.totalorder %s103, %s104
      %p115 = scmp.eq.s32.totalorder %s20, 0
      %p116 = por %p114, %p115
      %p117 = scmp.ne.s32.totalorder %s103, %s104
      %p118 = scmp.eq.s32.totalorder %s21, 4
      %p119 = por %p117, %p118
      %p121 = scmp.ne.s32.totalorder %s104, %s120
      %p122 = scmp.eq.s32.totalorder %s21, 0
      %p123 = por %p121, %p122
      %s124 = ssub.s32 %s22, %s41
      %s125 = ssub.s32 %s23, %s37
      %s126 = sor.u32 %s124, %s125
      %p127 = scmp.eq.s32.totalorder %s126, 0
      %s129 = sadd.s32 %s128, 1
      %s130 = scalar_select %p127, %s128, %s129
      %p133 = pneg %p127
      %p134 = scmp.eq.s32.totalorder %s15, 4
      %p135 = por %p133, %p134
      %p136 = scmp.ne.s32.totalorder %s128, %s131
      %p137 = scmp.eq.s32.totalorder %s15, 0
      %p138 = por %p136, %p137
      %p139 = scmp.ne.s32.totalorder %s128, %s131
      %p140 = scmp.eq.s32.totalorder %s20, 4
      %p141 = por %p139, %p140
      %p142 = scmp.ne.s32.totalorder %s131, %s132
      %p143 = scmp.eq.s32.totalorder %s20, 0
      %p144 = por %p142, %p143
      %p145 = scmp.ne.s32.totalorder %s131, %s132
      %p146 = scmp.eq.s32.totalorder %s21, 4
      %p147 = por %p145, %p146
      %p149 = scmp.ne.s32.totalorder %s132, %s148
      %p150 = scmp.eq.s32.totalorder %s21, 0
      %p151 = por %p149, %p150
      %p152 = scmp.le.s32.totalorder 1, %s15
      %p153 = scmp.lt.s32.totalorder %s15, 6
      %p154 = pnand %p152, %p153
      %p155 = pneg %p154
      // Predicated region
      $region9: #{_matmul_impl.1} parent=5 // pred_check
        _
      $region10: #{_matmul_impl.1} parent=5 // pred_check_branch
        %157 = sbr.rel (%p154) target = $region12
      $region11: #{_matmul_impl.1} parent=5 // pred_region
        %s158 = ssub.s32 %s15, 1
        // Predicated region
        $region13: #{_matmul_impl.1} parent=11 // pred_check
          %p159 = pneg %p62
        $region14: #{_matmul_impl.1} parent=11 // pred_check_branch
          %161 = sbr.rel (%p159) target = $region16
        $region15: #{_matmul_impl.1} parent=11 // pred_region
          %s162 = smul.u32 3, %s27
          %p163 = scmp.lt.s32.totalorder %s25, 0
          %s164 = scalar_select %p163, %s25, 0
          %p165 = scmp.lt.s32.totalorder %s162, 2
          %s166 = scalar_select %p165, %s162, 2
          %s167 = smul.addr %s164, 3
          %s168 = sadd.s32 %s166, %s167
          %s169 = scalar_lea.vmem %s0, %s168
          %s170 = smul.u32 3, %s27
        $region16: #{_matmul_impl.1} parent=11 // pred_fallthru
          _
      $region12: #{_matmul_impl.1} parent=5 // pred_fallthru
        _
      %p171 = scmp.lt.s32.totalorder %s15, 5
      // Predicated region
      $region17: #{_matmul_impl.1} parent=5 // pred_check
        %p172 = pneg %p171
      $region18: #{_matmul_impl.1} parent=5 // pred_check_branch
        %174 = sbr.rel (%p172) target = $region20
      $region19: #{_matmul_impl.1} parent=5 // pred_region
        // Predicated region
        $region21: #{_matmul_impl.1} parent=19 // pred_check
          %p175 = pneg %p84
        $region22: #{_matmul_impl.1} parent=19 // pred_check_branch
          %177 = sbr.rel (%p175) target = $region24
        $region23: #{_matmul_impl.1} parent=19 // pred_region
          %s178 = sand.u32 %s74, 1
          %s179 = scalar_lea.sflag [#allocation4], %s178
          %s180 = sand.u32 %s74, 1
          %s181 = smul.addr %s180, 320
          %s182 = scalar_lea.vmem [#allocation3], %s181
          %s183 = smul.u32 40, %s24
          %s184 = smul.u32 2, %s23
          %s186 = ssub.s32 5120, 5120
          %187 = vsyncadd %s179, %s186
          %s188 = smul.addr %s183, 10
          %s189 = sadd.s32 %s184, %s188
          %s190 = smul.addr %s189, 64
          %s191 = scalar_lea.hbm %s1, %s190
          %s192 = sshll.u32 %s182, 4
          %s193 = int_to_ptr.vmem [resolvable:$true] %s192
          %198 = dma.hbm_to_vmem [thread:$0]  %s191, 5120, %s193, %s179, 640, 128, 8
        $region24: #{_matmul_impl.1} parent=19 // pred_fallthru
          _
        // Predicated region
        $region25: #{_matmul_impl.1} parent=19 // pred_check
          %p199 = pneg %p110
        $region26: #{_matmul_impl.1} parent=19 // pred_check_branch
          %201 = sbr.rel (%p199) target = $region28
        $region27: #{_matmul_impl.1} parent=19 // pred_region
          %s202 = smul.u32 2, %s23
          %p203 = scmp.lt.s32.totalorder %s202, 9
          %s204 = scalar_select %p203, %s202, 9
          %s205 = scalar_lea.vmem %s2, %s204
          %s206 = smul.u32 2, %s23
        $region28: #{_matmul_impl.1} parent=19 // pred_fallthru
          _
      $region20: #{_matmul_impl.1} parent=5 // pred_fallthru
        _
      %p207 = scmp.le.s32.totalorder 1, %s15
      %p208 = scmp.lt.s32.totalorder %s15, 6
      %p209 = pnand %p207, %p208
      %p210 = pneg %p209
      // Predicated region
      $region29: #{_matmul_impl.1} parent=5 // pred_check
        _
      $region30: #{_matmul_impl.1} parent=5 // pred_check_branch
        %212 = sbr.rel (%p209) target = $region32
      $region31: #{_matmul_impl.1} parent=5 // pred_region
        %s213 = ssub.s32 %s15, 1
        %s214 = sand.u32 %s77, 1
        %s215 = scalar_lea.sflag [#allocation4], %s214
        %s216 = sand.u32 %s77, 1
        %s217 = smul.addr %s216, 320
        %s218 = scalar_lea.vmem [#allocation3], %s217
        // Predicated region
        $region33: #{_matmul_impl.1} parent=31 // pred_check
          %p219 = pneg %p90
        $region34: #{_matmul_impl.1} parent=31 // pred_check_branch
          %221 = sbr.rel (%p219) target = $region36
        $region35: #{_matmul_impl.1} parent=31 // pred_region
          %222 = dma.done %s215, 5120
        $region36: #{_matmul_impl.1} parent=31 // pred_fallthru
          _
        %s223 = smul.u32 3, %s27
        %p224 = scmp.lt.s32.totalorder %s25, 0
        %s225 = scalar_select %p224, %s25, 0
        %p226 = scmp.lt.s32.totalorder %s223, 2
        %s227 = scalar_select %p226, %s223, 2
        %s228 = smul.addr %s225, 3
        %s229 = sadd.s32 %s227, %s228
        %s230 = scalar_lea.vmem %s0, %s229
        %p231 = pneg %p62
        %p232 = pneg %p59
        %s233 = sand.u32 %s77, 1
        %s234 = scalar_lea.sflag [#allocation4], %s233
        %s235 = sand.u32 %s77, 1
        %s236 = smul.addr %s235, 320
        %s237 = scalar_lea.vmem [#allocation3], %s236
        %p238 = pneg %p90
        %p239 = pneg %p87
        %s240 = smul.u32 2, %s26
        %p241 = scmp.lt.s32.totalorder %s240, 9
        %s242 = scalar_select %p241, %s240, 9
        %s243 = scalar_lea.vmem %s2, %s242
        %p244 = pneg %p116
        %p245 = pneg %p113
        %p246 = pneg %p144
        %p247 = pneg %p141
        %s248 = sand.u32 %s131, 1
        %s249 = scalar_lea.sflag [#allocation5], %s248
        %s250 = sand.u32 %s131, 1
        %s251 = smul.addr %s250, 2
        %s252 = scalar_lea.vmem [#allocation6], %s251
        %s253 = smul.u32 3, %s27
        %p254 = scmp.lt.s32.totalorder %s25, 0
        %s255 = scalar_select %p254, %s25, 0
        %p256 = scmp.lt.s32.totalorder %s253, 2
        %s257 = scalar_select %p256, %s253, 2
        %s258 = smul.addr %s255, 3
        %s259 = sadd.s32 %s257, %s258
        %s260 = scalar_lea.vmem %s0, %s259
        %s261 = smul.u32 3, %s27
        %s262 = smul.u32 40, %s27
        %s263 = smul.u32 2, %s26
        %s264 = smul.u32 2, %s26
        %p265 = scmp.lt.s32.totalorder %s264, 9
        %s266 = scalar_select %p265, %s264, 9
        %s267 = scalar_lea.vmem %s2, %s266
        %s268 = smul.u32 2, %s26
        %s269 = smul.u32 2, %s26
        %p271 = scmp.eq.s32.totalorder %s27, 0
        // Predicated region
        $region37: #{_matmul_impl.1} parent=31 // pred_check
          %p272 = pneg %p271
        $region38: #{_matmul_impl.1} parent=31 // pred_check_branch
          %274 = sbr.rel (%p272) target = $region40
        $region39: #{_matmul_impl.1} parent=31 // pred_region
          %v275 = vlaneseq
          %vm276 = vcmp.ge.s32.totalorder %v275, 0
          %vm277 = vcmp.lt.s32.totalorder %v275, 256
          %vm278 = vmand %vm276, %vm277
          %279 = vst.msk [vmem:[#allocation2] sm:$0x3] %vm278, 0.0
        $region40: #{_matmul_impl.1} parent=31 // pred_fallthru
          _
        %v280 = vld [vmem:[#allocation2] sm:$0x3]
        %v281 = vld [vmem:[%s260] sm:$0x7]
        %v282 = vld [vmem:[%s218] sm:$0xff]
        %v283 = vld [vmem:[%s218 + $0x8] sm:$0xff]
        %v284 = vld [vmem:[%s218 + $0x10] sm:$0xff]
        %v285 = vld [vmem:[%s218 + $0x18] sm:$0xff]
        %v286 = vld [vmem:[%s218 + $0x20] sm:$0xff]
        %v287 = vld [vmem:[%s218 + $0x28] sm:$0xff]
        %v288 = vld [vmem:[%s218 + $0x30] sm:$0xff]
        %v289 = vld [vmem:[%s218 + $0x38] sm:$0xff]
        %v290 = vld [vmem:[%s218 + $0x40] sm:$0xff]
        %v291 = vld [vmem:[%s218 + $0x48] sm:$0xff]
        %v292 = vld [vmem:[%s218 + $0x50] sm:$0xff]
        %v293 = vld [vmem:[%s218 + $0x58] sm:$0xff]
        %v294 = vld [vmem:[%s218 + $0x60] sm:$0xff]
        %v295 = vld [vmem:[%s218 + $0x68] sm:$0xff]
        %v296 = vld [vmem:[%s218 + $0x70] sm:$0xff]
        %v297 = vld [vmem:[%s218 + $0x78] sm:$0xff]
        %v298 = vld [vmem:[%s218 + $0x80] sm:$0xff]
        %v299 = vld [vmem:[%s218 + $0x88] sm:$0xff]
        %v300 = vld [vmem:[%s218 + $0x90] sm:$0xff]
        %v301 = vld [vmem:[%s218 + $0x98] sm:$0xff]
        %v302 = vld [vmem:[%s218 + $0xa0] sm:$0xff]
        %v303 = vld [vmem:[%s218 + $0xa8] sm:$0xff]
        %v304 = vld [vmem:[%s218 + $0xb0] sm:$0xff]
        %v305 = vld [vmem:[%s218 + $0xb8] sm:$0xff]
        %v306 = vld [vmem:[%s218 + $0xc0] sm:$0xff]
        %v307 = vld [vmem:[%s218 + $0xc8] sm:$0xff]
        %v308 = vld [vmem:[%s218 + $0xd0] sm:$0xff]
        %v309 = vld [vmem:[%s218 + $0xd8] sm:$0xff]
        %v310 = vld [vmem:[%s218 + $0xe0] sm:$0xff]
        %v311 = vld [vmem:[%s218 + $0xe8] sm:$0xff]
        %v312 = vld [vmem:[%s218 + $0xf0] sm:$0xff]
        %v313 = vld [vmem:[%s218 + $0xf8] sm:$0xff]
        %v314 = vld [vmem:[%s218 + $0x100] sm:$0xff]
        %v315 = vld [vmem:[%s218 + $0x108] sm:$0xff]
        %v316 = vld [vmem:[%s218 + $0x110] sm:$0xff]
        %v317 = vld [vmem:[%s218 + $0x118] sm:$0xff]
        %v318 = vld [vmem:[%s218 + $0x120] sm:$0xff]
        %v319 = vld [vmem:[%s218 + $0x128] sm:$0xff]
        %v320 = vld [vmem:[%s218 + $0x130] sm:$0xff]
        %v321 = vld [vmem:[%s218 + $0x138] sm:$0xff]
        %v324 = vunpack.c.l.s4 1966171168
        %v325 = vunpack.c.0.s8 %v324
        %v326 = vlaneseq
        %v327 = vshrl.u32 %v326, 7
        %v328 = vsub.s32 %v325, %v327
        %v329 = vrot.slane %v281, %v328
        %v330 = vcombine.high %v329, %v329
        %v332 = vunpack.c.l.s4 1966171168
        %v333 = vunpack.c.0.s8 %v332
        %v334 = vlaneseq
        %v335 = vshrl.u32 %v334, 7
        %v336 = vsub.s32 %v333, %v335
        %v337 = vrot.slane %v329, %v336
        %v339 = vunpack.c.l.s4 1966171168
        %v340 = vunpack.c.0.s8 %v339
        %v341 = vlaneseq
        %v342 = vshrl.u32 %v341, 7
        %v343 = vsub.s32 %v340, %v342
        %v344 = vrot.slane %v330, %v343
        %v345 = vcombine.high %v337, %v337
        %v388 = vunpack.c.l.b16 %v282
        %v389 = vunpack.c.h.b16 %v282
        %v390 = vunpack.c.l.b16 %v283
        %v391 = vunpack.c.h.b16 %v283
        %v392 = vunpack.c.l.b16 %v284
        %v393 = vunpack.c.h.b16 %v284
        %v394 = vunpack.c.l.b16 %v285
        %v395 = vunpack.c.h.b16 %v285
        %v396 = vunpack.c.l.b16 %v286
        %v397 = vunpack.c.h.b16 %v286
        %v398 = vunpack.c.l.b16 %v287
        %v399 = vunpack.c.h.b16 %v287
        %v400 = vunpack.c.l.b16 %v288
        %v401 = vunpack.c.h.b16 %v288
        %v402 = vunpack.c.l.b16 %v289
        %v403 = vunpack.c.h.b16 %v289
        %v404 = vunpack.c.l.b16 %v290
        %v405 = vunpack.c.h.b16 %v290
        %v406 = vunpack.c.l.b16 %v291
        %v407 = vunpack.c.h.b16 %v291
        %v408 = vunpack.c.l.b16 %v292
        %v409 = vunpack.c.h.b16 %v292
        %v410 = vunpack.c.l.b16 %v293
        %v411 = vunpack.c.h.b16 %v293
        %v412 = vunpack.c.l.b16 %v294
        %v413 = vunpack.c.h.b16 %v294
        %v414 = vunpack.c.l.b16 %v295
        %v415 = vunpack.c.h.b16 %v295
        %v416 = vunpack.c.l.b16 %v296
        %v417 = vunpack.c.h.b16 %v296
        %v418 = vunpack.c.l.b16 %v297
        %v419 = vunpack.c.h.b16 %v297
        %v420 = vunpack.c.l.b16 %v298
        %v421 = vunpack.c.h.b16 %v298
        %v422 = vunpack.c.l.b16 %v299
        %v423 = vunpack.c.h.b16 %v299
        %v424 = vunpack.c.l.b16 %v300
        %v425 = vunpack.c.h.b16 %v300
        %v426 = vunpack.c.l.b16 %v301
        %v427 = vunpack.c.h.b16 %v301
        %v428 = vunpack.c.l.b16 %v302
        %v429 = vunpack.c.h.b16 %v302
        %v430 = vunpack.c.l.b16 %v303
        %v431 = vunpack.c.h.b16 %v303
        %v432 = vunpack.c.l.b16 %v304
        %v433 = vunpack.c.h.b16 %v304
        %v434 = vunpack.c.l.b16 %v305
        %v435 = vunpack.c.h.b16 %v305
        %v436 = vunpack.c.l.b16 %v306
        %v437 = vunpack.c.h.b16 %v306
        %v438 = vunpack.c.l.b16 %v307
        %v439 = vunpack.c.h.b16 %v307
        %v440 = vunpack.c.l.b16 %v308
        %v441 = vunpack.c.h.b16 %v308
        %v442 = vunpack.c.l.b16 %v309
        %v443 = vunpack.c.h.b16 %v309
        %v444 = vunpack.c.l.b16 %v310
        %v445 = vunpack.c.h.b16 %v310
        %v446 = vunpack.c.l.b16 %v311
        %v447 = vunpack.c.h.b16 %v311
        %v448 = vunpack.c.l.b16 %v312
        %v449 = vunpack.c.h.b16 %v312
        %v450 = vunpack.c.l.b16 %v313
        %v451 = vunpack.c.h.b16 %v313
        %v452 = vunpack.c.l.b16 %v314
        %v453 = vunpack.c.h.b16 %v314
        %v454 = vunpack.c.l.b16 %v315
        %v455 = vunpack.c.h.b16 %v315
        %v456 = vunpack.c.l.b16 %v316
        %v457 = vunpack.c.h.b16 %v316
        %v458 = vunpack.c.l.b16 %v317
        %v459 = vunpack.c.h.b16 %v317
        %v460 = vunpack.c.l.b16 %v318
        %v461 = vunpack.c.h.b16 %v318
        %v462 = vunpack.c.l.b16 %v319
        %v463 = vunpack.c.h.b16 %v319
        %v464 = vunpack.c.l.b16 %v320
        %v465 = vunpack.c.h.b16 %v320
        %v466 = vunpack.c.l.b16 %v321
        %v467 = vunpack.c.h.b16 %v321
        %v468 = vpack.c.b16 %v390, %v388
        %v469 = vpack.c.b16 %v391, %v389
        %v470 = vpack.c.b16 %v394, %v392
        %v471 = vpack.c.b16 %v395, %v393
        %v472 = vpack.c.b16 %v398, %v396
        %v473 = vpack.c.b16 %v399, %v397
        %v474 = vpack.c.b16 %v402, %v400
        %v475 = vpack.c.b16 %v403, %v401
        %v476 = vpack.c.b16 %v406, %v404
        %v477 = vpack.c.b16 %v407, %v405
        %v478 = vpack.c.b16 %v410, %v408
        %v479 = vpack.c.b16 %v411, %v409
        %v480 = vpack.c.b16 %v414, %v412
        %v481 = vpack.c.b16 %v415, %v413
        %v482 = vpack.c.b16 %v418, %v416
        %v483 = vpack.c.b16 %v419, %v417
        %v484 = vpack.c.b16 %v422, %v420
        %v485 = vpack.c.b16 %v423, %v421
        %v486 = vpack.c.b16 %v426, %v424
        %v487 = vpack.c.b16 %v427, %v425
        %v488 = vpack.c.b16 %v430, %v428
        %v489 = vpack.c.b16 %v431, %v429
        %v490 = vpack.c.b16 %v434, %v432
        %v491 = vpack.c.b16 %v435, %v433
        %v492 = vpack.c.b16 %v438, %v436
        %v493 = vpack.c.b16 %v439, %v437
        %v494 = vpack.c.b16 %v442, %v440
        %v495 = vpack.c.b16 %v443, %v441
        %v496 = vpack.c.b16 %v446, %v444
        %v497 = vpack.c.b16 %v447, %v445
        %v498 = vpack.c.b16 %v450, %v448
        %v499 = vpack.c.b16 %v451, %v449
        %v500 = vpack.c.b16 %v454, %v452
        %v501 = vpack.c.b16 %v455, %v453
        %v502 = vpack.c.b16 %v458, %v456
        %v503 = vpack.c.b16 %v459, %v457
        %v504 = vpack.c.b16 %v462, %v460
        %v505 = vpack.c.b16 %v463, %v461
        %v506 = vpack.c.b16 %v466, %v464
        %v507 = vpack.c.b16 %v467, %v465
        %vm548 = vcmask 523264
        %v550 = vsel %vm548, %v345, 0
        %552 = vmatprep.subr.bf16.mxu0 %v469
        %553 = vmatpush1.bf16.msra.mxu0 %v468
        %554 = vmatprep.subr.bf16.mxu0 %v471
        %555 = vmatpush1.bf16.msra.mxu0 %v470
        %556 = vmatprep.subr.bf16.mxu0 %v473
        %557 = vmatpush1.bf16.msra.mxu0 %v472
        %558 = vmatprep.subr.bf16.mxu0 %v475
        %559 = vmatpush1.bf16.msra.mxu0 %v474
        %560 = vmatprep.subr.bf16.mxu0 %v477
        %561 = vmatpush1.bf16.msra.mxu0 %v476
        %562 = vmatprep.subr.bf16.mxu0 %v479
        %563 = vmatpush1.bf16.msra.mxu0 %v478
        %564 = vmatprep.subr.bf16.mxu0 %v481
        %565 = vmatpush1.bf16.msra.mxu0 %v480
        %566 = vmatprep.subr.bf16.mxu0 %v483
        %567 = vmatpush1.bf16.msra.mxu0 %v482
        %568 = vmatprep.subr.bf16.mxu0 %v485
        %569 = vmatpush1.bf16.msra.mxu0 %v484
        %570 = vmatprep.subr.bf16.mxu0 %v487
        %571 = vmatpush1.bf16.msra.mxu0 %v486
        %572 = vmatprep.subr.bf16.mxu0 %v489
        %573 = vmatpush1.bf16.msra.mxu0 %v488
        %574 = vmatprep.subr.bf16.mxu0 %v491
        %575 = vmatpush1.bf16.msra.mxu0 %v490
        %576 = vmatprep.subr.bf16.mxu0 %v493
        %577 = vmatpush1.bf16.msra.mxu0 %v492
        %578 = vmatprep.subr.bf16.mxu0 %v495
        %579 = vmatpush1.bf16.msra.mxu0 %v494
        %580 = vmatprep.subr.bf16.mxu0 %v497
        %581 = vmatpush1.bf16.msra.mxu0 %v496
        %582 = vmatprep.subr.bf16.mxu0 %v499
        %583 = vmatpush1.bf16.msra.mxu0 %v498
        %584 = vmatprep.mubr.bf16.mxu0 %v344
        %585 = vmatmul.mubr.bf16.gmra.mrb[0].mxu0 %v337
        %v586 = vpop.f32.mrb[0].mxu0
        %v587 = vadd.f32 0.0, %v586
        %v588 = vpop.f32.mrb[0].mxu0
        %v589 = vadd.f32 0.0, %v588
        %v590 = vpop.f32.mrb[0].mxu0
        %v591 = vpop.f32.mrb[0].mxu0
        %592 = vdwg.mxu0
        %593 = vmatprep.subr.bf16.mxu0 %v501
        %594 = vmatpush1.bf16.msra.mxu0 %v500
        %595 = vmatprep.subr.bf16.mxu0 %v503
        %596 = vmatpush1.bf16.msra.mxu0 %v502
        %597 = vmatprep.subr.bf16.mxu0 %v505
        %598 = vmatpush1.bf16.msra.mxu0 %v504
        %599 = vmatprep.subr.bf16.mxu0 %v507
        %600 = vmatpush1.bf16.msra.mxu0 %v506
        %601 = vmatprep.subr.bf16.mxu0 0
        %602 = vmatpush1.bf16.msra.mxu0 0
        %603 = vmatprep.subr.bf16.mxu0 0
        %604 = vmatpush1.bf16.msra.mxu0 0
        %605 = vmatprep.subr.bf16.mxu0 0
        %606 = vmatpush1.bf16.msra.mxu0 0
        %607 = vmatprep.subr.bf16.mxu0 0
        %608 = vmatpush1.bf16.msra.mxu0 0
        %609 = vmatprep.subr.bf16.mxu0 0
        %610 = vmatpush1.bf16.msra.mxu0 0
        %611 = vmatprep.subr.bf16.mxu0 0
        %612 = vmatpush1.bf16.msra.mxu0 0
        %613 = vmatprep.subr.bf16.mxu0 0
        %614 = vmatpush1.bf16.msra.mxu0 0
        %615 = vmatprep.subr.bf16.mxu0 0
        %616 = vmatpush1.bf16.msra.mxu0 0
        %617 = vmatprep.subr.bf16.mxu0 0
        %618 = vmatpush1.bf16.msra.mxu0 0
        %619 = vmatprep.subr.bf16.mxu0 0
        %620 = vmatpush1.bf16.msra.mxu0 0
        %621 = vmatprep.subr.bf16.mxu0 0
        %622 = vmatpush1.bf16.msra.mxu0 0
        %623 = vmatprep.subr.bf16.mxu0 0
        %624 = vmatpush1.bf16.msra.mxu0 0
        %625 = vmatprep.mubr.bf16.mxu0 0
        %626 = vmatmul.mubr.bf16.gmra.mrb[0].mxu0 %v550
        %v627 = vpop.f32.mrb[0].mxu0
        %v628 = vadd.f32 %v587, %v627
        %v629 = vpop.f32.mrb[0].mxu0
        %v630 = vadd.f32 %v589, %v629
        %v631 = vpop.f32.mrb[0].mxu0
        %v632 = vpop.f32.mrb[0].mxu0
        %633 = vdwg.mxu0
        %v636 = vcombine.low %v628, %v630
        %v638 = vunpack.c.l.s4 1966171168
        %v639 = vunpack.c.0.s8 %v638
        %v640 = vlaneseq
        %v641 = vshrl.u32 %v640, 7
        %v642 = vsub.s32 %v639, %v641
        %v643 = vrot.slane %v636, %v642
        %v645 = vunpack.c.l.s4 1966171168
        %v646 = vunpack.c.0.s8 %v645
        %v647 = vlaneseq
        %v648 = vshrl.u32 %v647, 7
        %v649 = vsub.s32 %v646, %v648
        %v650 = vrot.slane %v643, %v649
        %v652 = vadd.f32 %v280, %v650
        %v653 = vlaneseq
        %vm654 = vcmp.ge.s32.totalorder %v653, 0
        %vm655 = vcmp.lt.s32.totalorder %v653, 256
        %vm656 = vmand %vm654, %vm655
        %657 = vst.msk [vmem:[#allocation2] sm:$0x3] %vm656, %v652
        // Predicated region
        $region41: #{_matmul_impl.1} parent=31 // pred_check
          %p658 = pneg %p271
        $region42: #{_matmul_impl.1} parent=31 // pred_check_branch
          %660 = sbr.rel (%p658) target = $region44
        $region43: #{_matmul_impl.1} parent=31 // pred_region
          %v661 = vld [vmem:[#allocation2] sm:$0x3]
          %v662 = vld [vmem:[%s267] sm:$0x3]
          %v663 = vadd.f32 %v661, %v662
          %v664 = vsub.f32 0.0, %v663
          %v665 = vmul.f32 %v664, 1.442695
          %v666 = vpow.pop %v665
          %v667 = vadd.f32 %v666, 1.0
          %v668 = vrcp.pop %v667
          %v669 = vmul.f32 %v663, %v668
          %670 = vst.msk [vmem:[%s252] sm:$0x3] %vm656, %v669
        $region44: #{_matmul_impl.1} parent=31 // pred_fallthru
          _
        %s671 = sand.u32 %s131, 1
        %s672 = scalar_lea.sflag [#allocation5], %s671
        %s673 = sand.u32 %s131, 1
        %s674 = smul.addr %s673, 2
        %s675 = scalar_lea.vmem [#allocation6], %s674
        // Predicated region
        $region45: #{_matmul_impl.1} parent=31 // pred_check
          %p676 = pneg %p141
        $region46: #{_matmul_impl.1} parent=31 // pred_check_branch
          %678 = sbr.rel (%p676) target = $region48
        $region47: #{_matmul_impl.1} parent=31 // pred_region
          %s679 = smul.u32 2, %s26
          %s681 = ssub.s32 32, 32
          %682 = vsyncadd %s672, %s681
          %s683 = smul.addr %s25, 10
          %s684 = sadd.s32 %s679, %s683
          %s685 = smul.addr %s684, 16
          %s686 = scalar_lea.hbm %s3, %s685
          %s688 = sshll.u32 %s675, 4
          %s689 = int_to_ptr.vmem [resolvable:$true] %s688
          %691 = dma.vmem_to_hbm [thread:$0]  %s689, 32, %s686, %s672
        $region48: #{_matmul_impl.1} parent=31 // pred_fallthru
          _
      $region32: #{_matmul_impl.1} parent=5 // pred_fallthru
        _
      %p692 = scmp.le.s32.totalorder 2, %s15
      // Predicated region
      $region49: #{_matmul_impl.1} parent=5 // pred_check
        %p693 = pneg %p692
      $region50: #{_matmul_impl.1} parent=5 // pred_check_branch
        %695 = sbr.rel (%p693) target = $region52
      $region51: #{_matmul_impl.1} parent=5 // pred_region
        %s696 = ssub.s32 %s15, 2
        // Predicated region
        $region53: #{_matmul_impl.1} parent=51 // pred_check
          %p697 = pneg %p147
        $region54: #{_matmul_impl.1} parent=51 // pred_check_branch
          %699 = sbr.rel (%p697) target = $region56
        $region55: #{_matmul_impl.1} parent=51 // pred_region
          %s700 = sand.u32 %s132, 1
          %s701 = scalar_lea.sflag [#allocation5], %s700
          %s702 = sand.u32 %s132, 1
          %s703 = smul.addr %s702, 2
          %s704 = scalar_lea.vmem [#allocation6], %s703
          %705 = dma.done %s701, 32
        $region56: #{_matmul_impl.1} parent=51 // pred_fallthru
          _
      $region52: #{_matmul_impl.1} parent=5 // pred_fallthru
        _
    $region6: #{_matmul_impl.1} parent=1 // loop_footer
      %s19 = sadd.s32 1, %s15
    $region7: #{_matmul_impl.1} parent=1 // loop_footer_branch
      %14 = sbr.rel target = $region3
    $region8: #{_matmul_impl.1} parent=1 // loop_exit
      _
    %706 = vsyncpa [#allocation4], 1
    %s707 = scalar_lea.sflag [#allocation4], 1
    %708 = vsyncpa %s707, 1
    %709 = vsyncpa [#allocation5], 1
    %s710 = scalar_lea.sflag [#allocation5], 1
    %711 = vsyncpa %s710, 1

</llo_original>
